<compile_context>
chip_gen: v6e
topology: v6e:2x2x1
jax: 0.10.0
libtpu: 0.0.40
codegen_flags: <defaults>
</compile_context>

<pallas_src>
import functools

import jax
import jax.numpy as jnp
from jax import lax
from jax.experimental import pallas as pl
from jax.experimental.pallas import tpu as pltpu


EPS = 1e-5            # torch BatchNorm2d default eps
LANE = 128            # TPU vreg lane width


def _round_up(n, m):
    return ((n + m - 1) // m) * m


def _cp(c):
    """Channel-padding policy for stored activations: lane-aligned channels."""
    return _round_up(max(int(c), 1), LANE)


def make_divisible(value, divisor, min_value=None, round_down_protect=True):
    if min_value is None:
        min_value = divisor
    new_value = max(min_value, int(value + divisor / 2) // divisor * divisor)
    if round_down_protect and new_value < 0.9 * value:
        new_value += divisor
    return int(new_value)


def _vmem_limit_bytes():
    """Generation-dependent VMEM budget (v5e/v6e: 128 MiB, v7x: 64 MiB)."""
    cap = 64 * 1024 * 1024
    try:
        cap = int(pltpu.get_tpu_info().vmem_capacity_bytes)
    except Exception:
        pass
    return int(min(cap - cap // 4, 112 * 1024 * 1024))


_VMEM_LIMIT = _vmem_limit_bytes()


def _compiler_params():
    return pltpu.CompilerParams(
        dimension_semantics=("parallel",),
        vmem_limit_bytes=_VMEM_LIMIT,
    )


# ---------------------------------------------------------------------------
# In-kernel helpers: stride handling with unit-stride slices only (lane /
# channel dim is never touched by these reshapes).
# ---------------------------------------------------------------------------
def _subsample_h(v, offset, count, stride):
    """Rows offset, offset+stride, ... (count of them) of a (H, W, C) value."""
    if stride == 1:
        return lax.slice_in_dim(v, offset, offset + count, axis=0)
    v = lax.slice_in_dim(v, offset, offset + count * stride, axis=0)
    v = v.reshape(count, stride, v.shape[1], v.shape[2])
    return lax.index_in_dim(v, 0, axis=1, keepdims=False)


def _subsample_w(v, offset, count, stride):
    """Cols offset, offset+stride, ... (count of them) of a (H, W, C) value."""
    if stride == 1:
        return lax.slice_in_dim(v, offset, offset + count, axis=1)
    v = lax.slice_in_dim(v, offset, offset + count * stride, axis=1)
    v = v.reshape(v.shape[0], count, stride, v.shape[2])
    return lax.index_in_dim(v, 0, axis=2, keepdims=False)


# ---------------------------------------------------------------------------
# Kernel 1: row-tiled matmul + folded-BN bias + optional ReLU
# (used for 1x1 ConvBN layers and for the im2col'd stem conv)
# ---------------------------------------------------------------------------
def _matmul_bn_kernel(x_ref, w_ref, b_ref, o_ref, *, relu):
    acc = jnp.dot(x_ref[...], w_ref[...], preferred_element_type=jnp.float32)
    y = acc + b_ref[...]
    if relu:
        y = jnp.maximum(y, 0.0)
    o_ref[...] = y.astype(o_ref.dtype)


def matmul_bn_act(xr, wf, bias, *, relu, dtype=jnp.float32, row_tile=512):
    """(X @ W + b, optional ReLU) on the MXU.  X: (R, Cin_p) row-tiled."""
    R, cin_p = xr.shape
    cout_p = wf.shape[1]
    tr = min(row_tile, _round_up(R, 8))
    rp = _round_up(R, tr)
    if rp != R:
        xr = jnp.pad(xr, ((0, rp - R), (0, 0)))
    out = pl.pallas_call(
        functools.partial(_matmul_bn_kernel, relu=relu),
        out_shape=jax.ShapeDtypeStruct((rp, cout_p), dtype),
        grid_spec=pltpu.PrefetchScalarGridSpec(
            num_scalar_prefetch=0,
            grid=(rp // tr,),
            in_specs=[
                pl.BlockSpec((tr, cin_p), lambda i: (i, 0)),
                pl.BlockSpec((cin_p, cout_p), lambda i: (0, 0)),
                pl.BlockSpec((1, cout_p), lambda i: (0, 0)),
            ],
            out_specs=pl.BlockSpec((tr, cout_p), lambda i: (i, 0)),
        ),
        compiler_params=_compiler_params(),
    )(xr.astype(dtype), wf.astype(dtype), bias.astype(jnp.float32))
    return out[:R]


def _im2col(x, K, stride):
    """(N,H,W,C) -> patches (N*Hout*Wout, round_up(K*K*C, LANE)), (kh,kw,c)."""
    N, H, W, C = x.shape
    pad = (K - 1) // 2
    Hout = (H + 2 * pad - K) // stride + 1
    Wout = (W + 2 * pad - K) // stride + 1
    xp = jnp.pad(x, ((0, 0), (pad, pad), (pad, pad), (0, 0)))
    cols = []
    for kh in range(K):
        for kw in range(K):
            cols.append(
                xp[:, kh:kh + (Hout - 1) * stride + 1:stride,
                   kw:kw + (Wout - 1) * stride + 1:stride, :])
    patches = jnp.concatenate(cols, axis=-1).reshape(N * Hout * Wout, K * K * C)
    kkc_p = _round_up(K * K * C, LANE)
    if kkc_p != K * K * C:
        patches = jnp.pad(patches, ((0, 0), (0, kkc_p - K * K * C)))
    return patches, (N, Hout, Wout)


def dense_conv_bn_act(x, wf, bias, *, K, stride, relu=True, dtype=jnp.float32):
    """KxK conv (pad=(K-1)//2, no bias) + folded BN + ReLU via wrapper-side
    im2col at the REAL input channel depth + one fused MXU matmul kernel."""
    patches, (N, Hout, Wout) = _im2col(x.astype(dtype), K, stride)
    assert patches.shape[1] == wf.shape[0], (patches.shape, wf.shape)
    y = matmul_bn_act(patches, wf, bias, relu=relu, dtype=dtype)
    return y.reshape(N, Hout, Wout, wf.shape[1])


def pointwise_conv_bn_act(x, wf, bias, *, relu, dtype=jnp.float32, row_tile=512):
    """1x1 conv + folded BN + optional ReLU."""
    N, H, W, cin_p = x.shape
    y = matmul_bn_act(x.reshape(N * H * W, cin_p), wf, bias, relu=relu,
                      dtype=dtype, row_tile=row_tile)
    return y.reshape(N, H, W, wf.shape[1])


# ---------------------------------------------------------------------------
# Kernel 2: fully fused UniversalInvertedBottleneck block
#   start-dw (VPU) -> expand 1x1 + ReLU (MXU) -> middle-dw + ReLU (VPU)
#   -> proj 1x1 (MXU) -> identity residual.
# One batch element per grid step; the expanded activation stays in VMEM.
# ---------------------------------------------------------------------------
def _uib_kernel(*refs, start_k, middle_k, stride, H, W, Hout, Wout, identity):
    it = iter(refs)
    x_ref = next(it)
    if start_k:
        sdw_w, sdw_b = next(it), next(it)
    exp_w, exp_b = next(it), next(it)
    if middle_k:
        mdw_w, mdw_b = next(it), next(it)
    proj_w, proj_b = next(it), next(it)
    o_ref = next(it)

    p_s = (start_k - 1) // 2 if start_k else 0
    p_m = (middle_k - 1) // 2 if middle_k else 0

    xp = x_ref[0]                                  # (Hin, Win, Cin_p), pre-padded
    Hin, Win, cin = xp.shape
    Hexp, Wexp = Hin - 2 * p_s, Win - 2 * p_s      # spatial size of expand input
    mxu_dt = exp_w.dtype

    # ---- optional start depthwise (stride 1, linear): VPU, valid conv over
    #      the pre-padded window -> (Hexp, Wexp, Cin_p) ----
    if start_k:
        acc = jnp.zeros((Hexp, Wexp, cin), jnp.float32)
        for kh in range(start_k):
            for kw in range(start_k):
                tap = xp[kh:kh + Hexp, kw:kw + Wexp, :]
                acc = acc + tap.astype(jnp.float32) * sdw_w[kh * start_k + kw]
        h = (acc + sdw_b[0]).astype(mxu_dt)
    else:
        h = xp

    # ---- expand 1x1 + ReLU: one MXU matmul; result never leaves VMEM ----
    e_p = exp_w.shape[1]
    hm = jnp.dot(h.reshape(Hexp * Wexp, cin).astype(mxu_dt), exp_w[...],
                 preferred_element_type=jnp.float32)
    hm = jnp.maximum(hm + exp_b[...], 0.0)
    h = hm.reshape(Hexp, Wexp, e_p)                # f32, VMEM-resident

    # ---- optional middle depthwise (stride s) + ReLU: VPU ----
    if middle_k:
        if Hexp > H or Wexp > W:
            # Zero the border ring so it acts as the conv's zero padding of the
            # true (H, W) expanded activation.
            r = lax.broadcasted_iota(jnp.int32, (Hexp, Wexp), 0)
            c = lax.broadcasted_iota(jnp.int32, (Hexp, Wexp), 1)
            interior = ((r >= p_m) & (r < p_m + H) &
                        (c >= p_m) & (c < p_m + W))
            h = jnp.where(interior[:, :, None], h, 0.0)
        acc = jnp.zeros((Hout, Wout, e_p), jnp.float32)
        for kh in range(middle_k):
            hh = _subsample_h(h, kh, Hout, stride)
            for kw in range(middle_k):
                acc = acc + _subsample_w(hh, kw, Wout, stride) * mdw_w[kh * middle_k + kw]
        h = jnp.maximum(acc + mdw_b[0], 0.0)

    # ---- project 1x1 (linear, MXU) + fused identity residual ----
    y = jnp.dot(h.reshape(Hout * Wout, e_p).astype(mxu_dt), proj_w[...],
                preferred_element_type=jnp.float32)
    y = (y + proj_b[...]).reshape(Hout, Wout, proj_w.shape[1])
    if identity:
        pt = p_s + p_m
        y = y + xp[pt:pt + H, pt:pt + W, :].astype(jnp.float32)
    o_ref[0] = y.astype(o_ref.dtype)


def uib_block(x, L, dtype=jnp.float32):
    """One fused UniversalInvertedBottleneck block (whole image / grid step)."""
    N, H, W, cin_p = x.shape
    start_k, middle_k = L["start_k"], L["middle_k"]
    stride = L["s"] if middle_k else 1           # middle_dw_downsample=True default
    p_s = (start_k - 1) // 2 if start_k else 0
    p_m = (middle_k - 1) // 2 if middle_k else 0
    if middle_k:
        Hout = (H + 2 * p_m - middle_k) // stride + 1
        Wout = (W + 2 * p_m - middle_k) // stride + 1
        eh = max(0, Hout * stride + middle_k - 1 - (H + 2 * p_m))
        ew = max(0, Wout * stride + middle_k - 1 - (W + 2 * p_m))
    else:
        Hout, Wout, eh, ew = H, W, 0, 0
    pt = p_s + p_m
    xc = x.astype(dtype)
    if pt or eh or ew:
        xc = jnp.pad(xc, ((0, 0), (pt, pt + eh), (pt, pt + ew), (0, 0)))
    Hin, Win = xc.shape[1], xc.shape[2]
    cout_p = L["proj_wf"].shape[1]

    inputs = [xc]
    in_specs = [pl.BlockSpec((1, Hin, Win, cin_p), lambda i: (i, 0, 0, 0))]

    def add_const(arr, adt):
        inputs.append(arr.astype(adt))
        in_specs.append(pl.BlockSpec(arr.shape, lambda i: (0, 0)))

    if start_k:
        add_const(L["sdw_wf"], jnp.float32)      # depthwise math stays f32 (v5e VPU)
        add_const(L["sdw_bias"], jnp.float32)
    add_const(L["exp_wf"], dtype)
    add_const(L["exp_bias"], jnp.float32)
    if middle_k:
        add_const(L["mdw_wf"], jnp.float32)
        add_const(L["mdw_bias"], jnp.float32)
    add_const(L["proj_wf"], dtype)
    add_const(L["proj_bias"], jnp.float32)

    kernel = functools.partial(
        _uib_kernel, start_k=start_k, middle_k=middle_k, stride=stride,
        H=H, W=W, Hout=Hout, Wout=Wout, identity=L["identity"])

    return pl.pallas_call(
        kernel,
        out_shape=jax.ShapeDtypeStruct((N, Hout, Wout, cout_p), dtype),
        grid_spec=pltpu.PrefetchScalarGridSpec(
            num_scalar_prefetch=0,
            grid=(N,),
            in_specs=in_specs,
            out_specs=pl.BlockSpec((1, Hout, Wout, cout_p), lambda i: (i, 0, 0, 0)),
        ),
        compiler_params=_compiler_params(),
    )(*inputs)


# ---------------------------------------------------------------------------
# Parameter construction (matches the PyTorch module structure)
# ---------------------------------------------------------------------------
class _Keys:
    def __init__(self, key):
        self._key = key

    def __call__(self):
        self._key, sub = jax.random.split(self._key)
        return sub


def _conv_init(key, cout, cin_per_group, k):
    n = k * k * cout
    return jax.random.normal(key, (cout, cin_per_group, k, k), jnp.float32) * (2.0 / n) ** 0.5


def _bn_init(keys, c):
    # Random eval-mode BN statistics (exercises BN folding).
    return {
        "gamma": 1.0 + 0.1 * jax.random.normal(keys(), (c,), jnp.float32),
        "beta": 0.1 * jax.random.normal(keys(), (c,), jnp.float32),
        "mean": 0.1 * jax.random.normal(keys(), (c,), jnp.float32),
        "var": 0.5 + jax.random.uniform(keys(), (c,), jnp.float32),
    }


def init_mobilenetv4(key, block_specs, in_channels=1):
    """Build MobileNetV4 parameters grouped by block_idx (insertion order)."""
    keys = _Keys(key)
    blocks = {}
    c = in_channels
    for spec in block_specs:
        btype = spec[0]
        if btype == "conv_bn":
            k, s, f, idx = spec[1:]
            layer = {
                "type": "conv_bn", "k": int(k), "s": int(s),
                "cin": c, "cout": int(f),
                "w": _conv_init(keys(), int(f), c, int(k)),
                "bn": _bn_init(keys, int(f)),
            }
        elif btype == "uib":
            start_k, middle_k, s, f, e, idx = spec[1:]
            ec = make_divisible(c * e, 8)
            layer = {
                "type": "uib", "start_k": int(start_k), "middle_k": int(middle_k),
                "s": int(s), "cin": c, "cout": int(f), "expand_c": ec,
                "identity": (int(s) == 1 and c == int(f)),
                "start_dw": ({"w": _conv_init(keys(), c, 1, int(start_k)),
                              "bn": _bn_init(keys, c)} if start_k else None),
                "expand": {"w": _conv_init(keys(), ec, c, 1), "bn": _bn_init(keys, ec)},
                "middle_dw": ({"w": _conv_init(keys(), ec, 1, int(middle_k)),
                               "bn": _bn_init(keys, ec)} if middle_k else None),
                "proj": {"w": _conv_init(keys(), int(f), ec, 1), "bn": _bn_init(keys, int(f))},
            }
        else:
            raise NotImplementedError(btype)
        blocks.setdefault(idx, []).append(layer)
        c = int(f)
    return list(blocks.items())


# ---------------------------------------------------------------------------
# Pure-JAX reference (NCHW, mirrors the PyTorch forward, eval-mode BN)
# ---------------------------------------------------------------------------
def _bn_ref(x, bn):
    inv = 1.0 / jnp.sqrt(bn["var"] + EPS)
    scale = (bn["gamma"] * inv)[None, :, None, None]
    shift = (bn["beta"] - bn["mean"] * bn["gamma"] * inv)[None, :, None, None]
    return x * scale + shift


def _conv_ref(x, w, stride, groups=1):
    k = w.shape[-1]
    pad = (k - 1) // 2
    return lax.conv_general_dilated(
        x, w, (stride, stride), ((pad, pad), (pad, pad)),
        dimension_numbers=("NCHW", "OIHW", "NCHW"),
        feature_group_count=groups,
        precision=lax.Precision.HIGHEST,
    )


def mobilenetv4_reference(x, blocks):
    outs = []
    for _, layers in blocks:
        for L in layers:
            if L["type"] == "conv_bn":
                x = jnp.maximum(_bn_ref(_conv_ref(x, L["w"], L["s"]), L["bn"]), 0.0)
            else:
                sc = x
                if L["start_k"]:
                    # middle_dw_downsample=True (module default) -> start dw stride 1
                    x = _bn_ref(_conv_ref(x, L["start_dw"]["w"], 1, groups=L["cin"]),
                                L["start_dw"]["bn"])
                x = jnp.maximum(_bn_ref(_conv_ref(x, L["expand"]["w"], 1),
                                        L["expand"]["bn"]), 0.0)
                if L["middle_k"]:
                    x = jnp.maximum(
                        _bn_ref(_conv_ref(x, L["middle_dw"]["w"], L["s"],
                                          groups=L["expand_c"]),
                                L["middle_dw"]["bn"]), 0.0)
                x = _bn_ref(_conv_ref(x, L["proj"]["w"], 1), L["proj"]["bn"])
                if L["identity"]:
                    x = x + sc
        outs.append(x)
    return outs


# ---------------------------------------------------------------------------
# One-time BN folding + lane padding for the Pallas path
# ---------------------------------------------------------------------------
def _fold_bn(bn):
    inv = 1.0 / jnp.sqrt(bn["var"] + EPS)
    scale = bn["gamma"] * inv
    bias = bn["beta"] - bn["mean"] * scale
    return scale, bias


def _pad_to(a, axis, size):
    if a.shape[axis] == size:
        return a
    widths = [(0, 0)] * a.ndim
    widths[axis] = (0, size - a.shape[axis])
    return jnp.pad(a, widths)


def _prep_pointwise(w_oihw, bn, cin_p):
    cout = w_oihw.shape[0]
    scale, bias = _fold_bn(bn)
    w = jnp.transpose(w_oihw[:, :, 0, 0], (1, 0)) * scale           # (Cin, Cout)
    wf = _pad_to(_pad_to(w, 0, cin_p), 1, _cp(cout))
    bf = _pad_to(bias.reshape(1, cout), 1, _cp(cout))
    return wf, bf


def _prep_dense(w_oihw, bn, cin_p):
    cout, _, k, _ = w_oihw.shape
    scale, bias = _fold_bn(bn)
    w = jnp.transpose(w_oihw, (2, 3, 1, 0)) * scale                 # (K, K, Cin, Cout)
    w = _pad_to(w, 2, cin_p).reshape(k * k * cin_p, cout)           # (kh, kw, c) order
    wf = _pad_to(_pad_to(w, 0, _round_up(k * k * cin_p, LANE)), 1, _cp(cout))
    bf = _pad_to(bias.reshape(1, cout), 1, _cp(cout))
    return wf, bf


def _prep_depthwise(w_oihw, bn, c_p):
    c, _, k, _ = w_oihw.shape
    scale, bias = _fold_bn(bn)
    w = jnp.transpose(w_oihw[:, 0], (1, 2, 0)) * scale              # (K, K, C)
    wf = _pad_to(w.reshape(k * k, c), 1, c_p)
    bf = _pad_to(bias.reshape(1, c), 1, c_p)
    return wf, bf


def prepare_pallas_model(blocks):
    cur = blocks[0][1][0]["cin"]          # channel count of the stored activation
    pblocks = []
    for idx, layers in blocks:
        players = []
        for L in layers:
            if L["type"] == "conv_bn":
                if L["k"] == 1:
                    wf, bf = _prep_pointwise(L["w"], L["bn"], cur)
                else:
                    wf, bf = _prep_dense(L["w"], L["bn"], cur)
                players.append({"type": "conv_bn", "k": L["k"], "s": L["s"],
                                "cout": L["cout"], "wf": wf, "bias": bf})
            else:
                ep = _cp(L["expand_c"])
                p = {"type": "uib", "start_k": L["start_k"], "middle_k": L["middle_k"],
                     "s": L["s"], "cout": L["cout"], "identity": L["identity"]}
                if L["start_k"]:
                    p["sdw_wf"], p["sdw_bias"] = _prep_depthwise(
                        L["start_dw"]["w"], L["start_dw"]["bn"], cur)
                p["exp_wf"], p["exp_bias"] = _prep_pointwise(
                    L["expand"]["w"], L["expand"]["bn"], cur)
                if L["middle_k"]:
                    p["mdw_wf"], p["mdw_bias"] = _prep_depthwise(
                        L["middle_dw"]["w"], L["middle_dw"]["bn"], ep)
                p["proj_wf"], p["proj_bias"] = _prep_pointwise(
                    L["proj"]["w"], L["proj"]["bn"], ep)
                players.append(p)
            cur = _cp(L["cout"])
        pblocks.append((idx, players))
    return pblocks


def mobilenetv4_pallas(x_nchw, pblocks, dtype=jnp.float32):
    """MobileNetV4 forward with fused Pallas kernels.

    Activations stay NHWC with lane-padded channels end-to-end (the stem input
    keeps its real channel count); per-block outputs are returned as unpadded
    NCHW f32 to match the PyTorch module.
    """
    x = jnp.transpose(x_nchw, (0, 2, 3, 1)).astype(dtype)   # NHWC, real stem channels
    outs = []
    for _, layers in pblocks:
        c_real = None
        for L in layers:
            if L["type"] == "conv_bn":
                if L["k"] == 1:
                    x = pointwise_conv_bn_act(x, L["wf"], L["bias"], relu=True, dtype=dtype)
                else:
                    x = dense_conv_bn_act(x, L["wf"], L["bias"], K=L["k"],
                                          stride=L["s"], relu=True, dtype=dtype)
            else:
                x = uib_block(x, L, dtype=dtype)
            c_real = L["cout"]
        outs.append(jnp.transpose(x[..., :c_real].astype(jnp.float32), (0, 3, 1, 2)))
    return outs


if __name__ == "__main__":
    # Small MobileNetV4 variant exercising every layer type: dense stem conv
    # (k3 s2), UIB with start-dw + stride-2 k5 middle-dw, UIB with identity
    # residual, UIB without middle-dw, and a 1x1 ConvBN head.
    # (block_type, *cfg, block_idx); the module starts from in_channels = 1.
    block_specs = [
        ("conv_bn", 3, 2, 16, "layer1"),
        ("uib", 3, 5, 2, 32, 4.0, "layer2"),
        ("uib", 0, 3, 1, 32, 2.0, "layer2"),
        ("uib", 3, 0, 1, 48, 3.0, "layer3"),
        ("conv_bn", 1, 1, 64, "layer4"),
    ]

    key = jax.random.PRNGKey(0)
    kp, kx = jax.random.split(key)
    blocks = init_mobilenetv4(kp, block_specs, in_channels=1)
    x = jax.random.normal(kx, (2, 1, 16, 16), jnp.float32)

    refs = mobilenetv4_reference(x, blocks)
    pblocks = prepare_pallas_model(blocks)

    # f32 run: strict check against the pure-JAX reference.
    outs = mobilenetv4_pallas(x, pblocks, dtype=jnp.float32)
    outs = [jax.block_until_ready(o) for o in outs]
    assert len(outs) == len(refs), (len(outs), len(refs))
    for o, r in zip(outs, refs):
        assert o.shape == r.shape, (o.shape, r.shape)
        assert jnp.allclose(o, r, atol=5e-2, rtol=5e-2), float(jnp.max(jnp.abs(o - r)))

    # bf16 storage / MXU run (f32 accumulation): ~2x less HBM on this
    # memory-bound network.  Loose relative-error sanity check.
    outs_bf16 = mobilenetv4_pallas(x, pblocks, dtype=jnp.bfloat16)
    outs_bf16 = [jax.block_until_ready(o) for o in outs_bf16]
    for o, r in zip(outs_bf16, refs):
        assert o.shape == r.shape, (o.shape, r.shape)
        rel = jnp.linalg.norm(o - r) / (jnp.linalg.norm(r) + 1e-6)
        assert bool(rel < 0.1), float(rel)

    print("KERNEL_OK")
</pallas_src>

<mosaic_0001>
module attributes {stable_mosaic.version = 11 : i64} {
  func.func @_matmul_bn_kernel(%arg0: i32, %arg1: memref<128x128xf32, #tpu.memory_space<vmem>>, %arg2: memref<128x128xf32, #tpu.memory_space<vmem>>, %arg3: memref<1x128xf32, #tpu.memory_space<vmem>>, %arg4: memref<128x128xf32, #tpu.memory_space<vmem>>) attributes {dimension_semantics = [#tpu.dimension_semantics<parallel>], iteration_bounds = array<i64: 1>, scalar_prefetch = 0 : i64, scratch_operands = 0 : i64, tpu.core_type = #tpu.core_type<tc>, window_params = [{transform_indices = @transform_0, window_bounds = array<i64: 128, 128>}, {pipeline_mode = #tpu.pipeline_mode<synchronous>, transform_indices = @transform_1, window_bounds = array<i64: 128, 128>}, {pipeline_mode = #tpu.pipeline_mode<synchronous>, transform_indices = @transform_2, window_bounds = array<i64: 1, 128>}, {transform_indices = @transform_3, window_bounds = array<i64: 128, 128>}]} {
    %c0 = arith.constant 0 : index
    %c0_0 = arith.constant 0 : index
    %0 = vector.load %arg1[%c0, %c0_0] : memref<128x128xf32, #tpu.memory_space<vmem>>, vector<128x128xf32>
    %c0_1 = arith.constant 0 : index
    %c0_2 = arith.constant 0 : index
    %1 = vector.load %arg2[%c0_1, %c0_2] : memref<128x128xf32, #tpu.memory_space<vmem>>, vector<128x128xf32>
    %cst = arith.constant dense<0.000000e+00> : vector<128x128xf32>
    %2 = tpu.matmul %0, %1, %cst {dimension_numbers = #tpu.dot_dimension_numbers<[1], [0], [0], [1], [0, 0, 1, 1], [], []>} : vector<128x128xf32>, vector<128x128xf32>, vector<128x128xf32> -> vector<128x128xf32>
    %c0_3 = arith.constant 0 : index
    %c0_4 = arith.constant 0 : index
    %3 = vector.load %arg3[%c0_3, %c0_4] : memref<1x128xf32, #tpu.memory_space<vmem>>, vector<1x128xf32>
    %4 = vector.broadcast %3 : vector<1x128xf32> to vector<128x128xf32>
    %5 = arith.addf %2, %4 : vector<128x128xf32>
    %cst_5 = arith.constant 0.000000e+00 : f32
    %6 = vector.broadcast %cst_5 : f32 to vector<128x128xf32>
    %7 = arith.maximumf %5, %6 : vector<128x128xf32>
    %c0_6 = arith.constant 0 : index
    %c0_7 = arith.constant 0 : index
    %8 = vector.load %arg4[%c0_6, %c0_7] : memref<128x128xf32, #tpu.memory_space<vmem>>, vector<128x128xf32>
    tpu.vector_store %arg4[%c0_6, %c0_7], %7 {strides = array<i32>} : memref<128x128xf32, #tpu.memory_space<vmem>>, vector<128x128xf32>,
    return
  }
  func.func @transform_0(%arg0: i32) -> (i32, i32) {
    %c0_i32 = arith.constant 0 : i32
    %c0_i32_0 = arith.constant 0 : i32
    return %arg0, %c0_i32 : i32, i32
  }
  func.func @transform_1(%arg0: i32) -> (i32, i32) {
    %c0_i32 = arith.constant 0 : i32
    %c0_i32_0 = arith.constant 0 : i32
    %c0_i32_1 = arith.constant 0 : i32
    return %c0_i32, %c0_i32_0 : i32, i32
  }
  func.func @transform_2(%arg0: i32) -> (i32, i32) {
    %c0_i32 = arith.constant 0 : i32
    %c0_i32_0 = arith.constant 0 : i32
    %c0_i32_1 = arith.constant 0 : i32
    return %c0_i32, %c0_i32_0 : i32, i32
  }
  func.func @transform_3(%arg0: i32) -> (i32, i32) {
    %c0_i32 = arith.constant 0 : i32
    %c0_i32_0 = arith.constant 0 : i32
    return %arg0, %c0_i32 : i32, i32
  }
}

</mosaic_0001>

<llo_original>
// kernel: tpu_custom_call.1
$region0: #{tpu_custom_call.1}
  #allocation0 [shape = 'u32[]', space=smem, size = 0x4, offset = 0x4, fixed_abs, tag = 'smem constant byte address 0x4 - core index']
  #allocation1 [shape = 'u32[144,128]{1,0:T(1,128)}', space=vmem, size = 0x12000, scoped, tag = 'internal scratch']
  %s0 = inlined_call_operand.hbm [shape: f32[128,128], index: 0, kind: input, shape index: {}]
  %s1 = inlined_call_operand.hbm [shape: f32[128,128], index: 1, kind: input, shape index: {}]
  %s2 = inlined_call_operand.vmem [shape: f32[1,128], index: 2, kind: input, shape index: {}]
  %s3 = inlined_call_operand.hbm [shape: f32[128,128], index: 3, kind: output, shape index: {}]
  %s4 = sld [smem:[#allocation0]]
  $region30: #{tpu_custom_call.1} parent=0
    _
  %s6 = ssub.s32 1, %s4
  %s7 = scalar_select 0, %s6, %s4
  $region1: #{tpu_custom_call.1} parent=0
    #allocation2 [shape = 'u8[65536]{0}', space=vmem, size = 0x10000, scoped, tag = 'input window, operand 0, single buffered']
    #allocation3 [shape = 's32[1]{0}', space=sflag, size = 0x4, scoped, tag = 'scoped memory for tpu_custom_call.1']
    #allocation4 [shape = 's32[1]{0}', space=sflag, size = 0x4, scoped, tag = 'scoped memory for tpu_custom_call.1']
    #allocation5 [shape = 'u8[65536]{0}', space=vmem, size = 0x10000, scoped, tag = 'input window, operand 1, single buffered']
    #allocation6 [shape = 's32[1]{0}', space=sflag, size = 0x4, scoped, tag = 'scoped memory for tpu_custom_call.1']
    #allocation7 [shape = 'u8[65536]{0}', space=vmem, size = 0x10000, scoped, tag = 'output window, operand 0, single buffered']
    %8 = vsyncpa [#allocation3], 0
    %9 = vsyncpa [#allocation6], 0
    %10 = vsyncpa [#allocation4], 0
    // Predicated region
    $region2: #{tpu_custom_call.1} parent=1 // pred_check
      _
    $region3: #{tpu_custom_call.1} parent=1 // pred_check_branch
      %12 = sbr.rel (0) target = $region5
    $region4: #{tpu_custom_call.1} parent=1 // pred_region
      %s14 = ssub.s32 2048, 2048
      %15 = vsyncadd [#allocation3], %s14
      %s16 = sshll.u32 [#allocation2], 4
      %s17 = int_to_ptr.vmem [resolvable:$true] %s16
      %22 = dma.hbm_to_vmem [thread:$0]  %s0, 2048, %s17, [#allocation3], 128, 128, 8
    $region5: #{tpu_custom_call.1} parent=1 // pred_fallthru
      _
    // Predicated region
    $region6: #{tpu_custom_call.1} parent=1 // pred_check
      _
    $region7: #{tpu_custom_call.1} parent=1 // pred_check_branch
      %24 = sbr.rel (0) target = $region9
    $region8: #{tpu_custom_call.1} parent=1 // pred_region
      %s26 = ssub.s32 2048, 2048
      %27 = vsyncadd [#allocation6], %s26
      %s28 = sshll.u32 [#allocation5], 4
      %s29 = int_to_ptr.vmem [resolvable:$true] %s28
      %34 = dma.hbm_to_vmem [thread:$0]  %s1, 2048, %s29, [#allocation6], 128, 128, 8
    $region9: #{tpu_custom_call.1} parent=1 // pred_fallthru
      _
    // Predicated region
    $region10: #{tpu_custom_call.1} parent=1 // pred_check
      _
    $region11: #{tpu_custom_call.1} parent=1 // pred_check_branch
      %36 = sbr.rel (0) target = $region13
    $region12: #{tpu_custom_call.1} parent=1 // pred_region
      _
    $region13: #{tpu_custom_call.1} parent=1 // pred_fallthru
      _
    // Predicated region
    $region14: #{tpu_custom_call.1} parent=1 // pred_check
      _
    $region15: #{tpu_custom_call.1} parent=1 // pred_check_branch
      %38 = sbr.rel (0) target = $region17
    $region16: #{tpu_custom_call.1} parent=1 // pred_region
      %39 = dma.done [#allocation3], 2048
    $region17: #{tpu_custom_call.1} parent=1 // pred_fallthru
      _
    // Predicated region
    $region18: #{tpu_custom_call.1} parent=1 // pred_check
      _
    $region19: #{tpu_custom_call.1} parent=1 // pred_check_branch
      %41 = sbr.rel (0) target = $region21
    $region20: #{tpu_custom_call.1} parent=1 // pred_region
      %42 = dma.done [#allocation6], 2048
    $region21: #{tpu_custom_call.1} parent=1 // pred_fallthru
      _
    %v43 = vld [vmem:[#allocation2] sm:$0xff]
    %v44 = vld [vmem:[#allocation2 + $0x8] sm:$0xff]
    %v45 = vld [vmem:[#allocation2 + $0x10] sm:$0xff]
    %v46 = vld [vmem:[#allocation2 + $0x18] sm:$0xff]
    %v47 = vld [vmem:[#allocation2 + $0x20] sm:$0xff]
    %v48 = vld [vmem:[#allocation2 + $0x28] sm:$0xff]
    %v49 = vld [vmem:[#allocation2 + $0x30] sm:$0xff]
    %v50 = vld [vmem:[#allocation2 + $0x38] sm:$0xff]
    %v51 = vld [vmem:[#allocation2 + $0x40] sm:$0xff]
    %v52 = vld [vmem:[#allocation2 + $0x48] sm:$0xff]
    %v53 = vld [vmem:[#allocation2 + $0x50] sm:$0xff]
    %v54 = vld [vmem:[#allocation2 + $0x58] sm:$0xff]
    %v55 = vld [vmem:[#allocation2 + $0x60] sm:$0xff]
    %v56 = vld [vmem:[#allocation2 + $0x68] sm:$0xff]
    %v57 = vld [vmem:[#allocation2 + $0x70] sm:$0xff]
    %v58 = vld [vmem:[#allocation2 + $0x78] sm:$0xff]
    %v59 = vld [vmem:[#allocation5] sm:$0xff]
    %v60 = vld [vmem:[#allocation5 + $0x8] sm:$0xff]
    %v61 = vld [vmem:[#allocation5 + $0x10] sm:$0xff]
    %v62 = vld [vmem:[#allocation5 + $0x18] sm:$0xff]
    %v63 = vld [vmem:[#allocation5 + $0x20] sm:$0xff]
    %v64 = vld [vmem:[#allocation5 + $0x28] sm:$0xff]
    %v65 = vld [vmem:[#allocation5 + $0x30] sm:$0xff]
    %v66 = vld [vmem:[#allocation5 + $0x38] sm:$0xff]
    %v67 = vld [vmem:[#allocation5 + $0x40] sm:$0xff]
    %v68 = vld [vmem:[#allocation5 + $0x48] sm:$0xff]
    %v69 = vld [vmem:[#allocation5 + $0x50] sm:$0xff]
    %v70 = vld [vmem:[#allocation5 + $0x58] sm:$0xff]
    %v71 = vld [vmem:[#allocation5 + $0x60] sm:$0xff]
    %v72 = vld [vmem:[#allocation5 + $0x68] sm:$0xff]
    %v73 = vld [vmem:[#allocation5 + $0x70] sm:$0xff]
    %v74 = vld [vmem:[#allocation5 + $0x78] sm:$0xff]
    %v75 = vld [vmem:[%s2] sm:$0x1]
    %v77 = vlaneseq
    %v78 = vshrl.u32 %v77, 7
    %v79 = vsub.s32 0, %v78
    %v80 = vrot.slane %v75, %v79
    %82 = vmatprep.subr.mxu0 0.0
    %83 = vmatpush1.msra.mxu0 %v74
    %84 = vmatprep.subr.mxu0 0.0
    %85 = vmatpush1.msra.mxu0 %v73
    %86 = vmatprep.subr.mxu0 0.0
    %87 = vmatpush1.msra.mxu0 %v72
    %88 = vmatprep.subr.mxu0 0.0
    %89 = vmatpush1.msra.mxu0 %v71
    %90 = vmatprep.subr.mxu0 0.0
    %91 = vmatpush1.msra.mxu0 %v70
    %92 = vmatprep.subr.mxu0 0.0
    %93 = vmatpush1.msra.mxu0 %v69
    %94 = vmatprep.subr.mxu0 0.0
    %95 = vmatpush1.msra.mxu0 %v68
    %96 = vmatprep.subr.mxu0 0.0
    %97 = vmatpush1.msra.mxu0 %v67
    %98 = vmatprep.subr.mxu0 0.0
    %99 = vmatpush1.msra.mxu0 %v66
    %100 = vmatprep.subr.mxu0 0.0
    %101 = vmatpush1.msra.mxu0 %v65
    %102 = vmatprep.subr.mxu0 0.0
    %103 = vmatpush1.msra.mxu0 %v64
    %104 = vmatprep.subr.mxu0 0.0
    %105 = vmatpush1.msra.mxu0 %v63
    %106 = vmatprep.subr.mxu0 0.0
    %107 = vmatpush1.msra.mxu0 %v62
    %108 = vmatprep.subr.mxu0 0.0
    %109 = vmatpush1.msra.mxu0 %v61
    %110 = vmatprep.subr.mxu0 0.0
    %111 = vmatpush1.msra.mxu0 %v60
    %112 = vmatprep.subr.mxu0 0.0
    %113 = vmatpush1.msra.mxu0 %v59
    %114 = vmatprep.subr.mxu0 0.0
    %115 = vmatpush2.msra.mxu0 0.0
    %116 = vmatprep.subr.mxu0 0.0
    %117 = vmatpush2.msra.mxu0 0.0
    %118 = vmatprep.subr.mxu0 0.0
    %119 = vmatpush2.msra.mxu0 0.0
    %120 = vmatprep.subr.mxu0 0.0
    %121 = vmatpush2.msra.mxu0 0.0
    %122 = vmatprep.subr.mxu0 0.0
    %123 = vmatpush2.msra.mxu0 0.0
    %124 = vmatprep.subr.mxu0 0.0
    %125 = vmatpush2.msra.mxu0 0.0
    %126 = vmatprep.subr.mxu0 0.0
    %127 = vmatpush2.msra.mxu0 0.0
    %128 = vmatprep.subr.mxu0 0.0
    %129 = vmatpush2.msra.mxu0 0.0
    %130 = vmatprep.subr.mxu0 0.0
    %131 = vmatpush2.msra.mxu0 0.0
    %132 = vmatprep.subr.mxu0 0.0
    %133 = vmatpush2.msra.mxu0 0.0
    %134 = vmatprep.subr.mxu0 0.0
    %135 = vmatpush2.msra.mxu0 0.0
    %136 = vmatprep.subr.mxu0 0.0
    %137 = vmatpush2.msra.mxu0 0.0
    %138 = vmatprep.subr.mxu0 0.0
    %139 = vmatpush2.msra.mxu0 0.0
    %140 = vmatprep.subr.mxu0 0.0
    %141 = vmatpush2.msra.mxu0 0.0
    %142 = vmatprep.subr.mxu0 0.0
    %143 = vmatpush2.msra.mxu0 0.0
    %144 = vmatprep.subr.mxu0 0.0
    %145 = vmatpush2.msra.mxu0 0.0
    %146 = vmatprep.mubr.f32.mxu0 0.0
    %147 = vmatmul.mubr.f32.gmra.mxu0 %v43
    %v148 = vpop.f32.mrf.mxu0
    %v149 = vadd.f32 %v80, %v148
    %v150 = vpop.f32.mrf.mxu0
    %151 = vmatprep.mubr.f32.mxu0 0.0
    %152 = vmatmul.mubr.f32.gmra.mxu0 %v44
    %v153 = vpop.f32.mrf.mxu0
    %v154 = vadd.f32 %v80, %v153
    %v155 = vpop.f32.mrf.mxu0
    %156 = vmatprep.mubr.f32.mxu0 0.0
    %157 = vmatmul.mubr.f32.gmra.mxu0 %v45
    %v158 = vpop.f32.mrf.mxu0
    %v159 = vadd.f32 %v80, %v158
    %v160 = vpop.f32.mrf.mxu0
    %161 = vmatprep.mubr.f32.mxu0 0.0
    %162 = vmatmul.mubr.f32.gmra.mxu0 %v46
    %v163 = vpop.f32.mrf.mxu0
    %v164 = vadd.f32 %v80, %v163
    %v165 = vpop.f32.mrf.mxu0
    %166 = vmatprep.mubr.f32.mxu0 0.0
    %167 = vmatmul.mubr.f32.gmra.mxu0 %v47
    %v168 = vpop.f32.mrf.mxu0
    %v169 = vadd.f32 %v80, %v168
    %v170 = vpop.f32.mrf.mxu0
    %171 = vmatprep.mubr.f32.mxu0 0.0
    %172 = vmatmul.mubr.f32.gmra.mxu0 %v48
    %v173 = vpop.f32.mrf.mxu0
    %v174 = vadd.f32 %v80, %v173
    %v175 = vpop.f32.mrf.mxu0
    %176 = vmatprep.mubr.f32.mxu0 0.0
    %177 = vmatmul.mubr.f32.gmra.mxu0 %v49
    %v178 = vpop.f32.mrf.mxu0
    %v179 = vadd.f32 %v80, %v178
    %v180 = vpop.f32.mrf.mxu0
    %181 = vmatprep.mubr.f32.mxu0 0.0
    %182 = vmatmul.mubr.f32.gmra.mxu0 %v50
    %v183 = vpop.f32.mrf.mxu0
    %v184 = vadd.f32 %v80, %v183
    %v185 = vpop.f32.mrf.mxu0
    %186 = vmatprep.mubr.f32.mxu0 0.0
    %187 = vmatmul.mubr.f32.gmra.mxu0 %v51
    %v188 = vpop.f32.mrf.mxu0
    %v189 = vadd.f32 %v80, %v188
    %v190 = vpop.f32.mrf.mxu0
    %191 = vmatprep.mubr.f32.mxu0 0.0
    %192 = vmatmul.mubr.f32.gmra.mxu0 %v52
    %v193 = vpop.f32.mrf.mxu0
    %v194 = vadd.f32 %v80, %v193
    %v195 = vpop.f32.mrf.mxu0
    %196 = vmatprep.mubr.f32.mxu0 0.0
    %197 = vmatmul.mubr.f32.gmra.mxu0 %v53
    %v198 = vpop.f32.mrf.mxu0
    %v199 = vadd.f32 %v80, %v198
    %v200 = vpop.f32.mrf.mxu0
    %201 = vmatprep.mubr.f32.mxu0 0.0
    %202 = vmatmul.mubr.f32.gmra.mxu0 %v54
    %v203 = vpop.f32.mrf.mxu0
    %v204 = vadd.f32 %v80, %v203
    %v205 = vpop.f32.mrf.mxu0
    %206 = vmatprep.mubr.f32.mxu0 0.0
    %207 = vmatmul.mubr.f32.gmra.mxu0 %v55
    %v208 = vpop.f32.mrf.mxu0
    %v209 = vadd.f32 %v80, %v208
    %v210 = vpop.f32.mrf.mxu0
    %211 = vmatprep.mubr.f32.mxu0 0.0
    %212 = vmatmul.mubr.f32.gmra.mxu0 %v56
    %v213 = vpop.f32.mrf.mxu0
    %v214 = vadd.f32 %v80, %v213
    %v215 = vpop.f32.mrf.mxu0
    %216 = vmatprep.mubr.f32.mxu0 0.0
    %217 = vmatmul.mubr.f32.gmra.mxu0 %v57
    %v218 = vpop.f32.mrf.mxu0
    %v219 = vadd.f32 %v80, %v218
    %v220 = vpop.f32.mrf.mxu0
    %221 = vmatprep.mubr.f32.mxu0 0.0
    %222 = vmatmul.mubr.f32.gmra.mxu0 %v58
    %v223 = vpop.f32.mrf.mxu0
    %v224 = vadd.f32 %v80, %v223
    %v225 = vpop.f32.mrf.mxu0
    %226 = vdwg.mxu0
    %v227 = vmax.f32 %v149, 0.0
    %v228 = vmax.f32 %v154, 0.0
    %v229 = vmax.f32 %v159, 0.0
    %v230 = vmax.f32 %v164, 0.0
    %v231 = vmax.f32 %v169, 0.0
    %v232 = vmax.f32 %v174, 0.0
    %v233 = vmax.f32 %v179, 0.0
    %v234 = vmax.f32 %v184, 0.0
    %v235 = vmax.f32 %v189, 0.0
    %v236 = vmax.f32 %v194, 0.0
    %v237 = vmax.f32 %v199, 0.0
    %v238 = vmax.f32 %v204, 0.0
    %v239 = vmax.f32 %v209, 0.0
    %v240 = vmax.f32 %v214, 0.0
    %v241 = vmax.f32 %v219, 0.0
    %v242 = vmax.f32 %v224, 0.0
    %243 = vst [vmem:[#allocation7] sm:$0xff] %v227
    %244 = vst [vmem:[#allocation7 + $0x8] sm:$0xff] %v228
    %245 = vst [vmem:[#allocation7 + $0x10] sm:$0xff] %v229
    %246 = vst [vmem:[#allocation7 + $0x18] sm:$0xff] %v230
    %247 = vst [vmem:[#allocation7 + $0x20] sm:$0xff] %v231
    %248 = vst [vmem:[#allocation7 + $0x28] sm:$0xff] %v232
    %249 = vst [vmem:[#allocation7 + $0x30] sm:$0xff] %v233
    %250 = vst [vmem:[#allocation7 + $0x38] sm:$0xff] %v234
    %251 = vst [vmem:[#allocation7 + $0x40] sm:$0xff] %v235
    %252 = vst [vmem:[#allocation7 + $0x48] sm:$0xff] %v236
    %253 = vst [vmem:[#allocation7 + $0x50] sm:$0xff] %v237
    %254 = vst [vmem:[#allocation7 + $0x58] sm:$0xff] %v238
    %255 = vst [vmem:[#allocation7 + $0x60] sm:$0xff] %v239
    %256 = vst [vmem:[#allocation7 + $0x68] sm:$0xff] %v240
    %257 = vst [vmem:[#allocation7 + $0x70] sm:$0xff] %v241
    %258 = vst [vmem:[#allocation7 + $0x78] sm:$0xff] %v242
    // Predicated region
    $region22: #{tpu_custom_call.1} parent=1 // pred_check
      _
    $region23: #{tpu_custom_call.1} parent=1 // pred_check_branch
      %260 = sbr.rel (0) target = $region25
    $region24: #{tpu_custom_call.1} parent=1 // pred_region
      %s262 = ssub.s32 2048, 2048
      %263 = vsyncadd [#allocation4], %s262
      %s264 = sshll.u32 [#allocation7], 4
      %s265 = int_to_ptr.vmem [resolvable:$true] %s264
      %270 = dma.vmem_to_hbm [thread:$0]  %s265, 2048, %s3, [#allocation4], 128, 128, 8
    $region25: #{tpu_custom_call.1} parent=1 // pred_fallthru
      _
    // Predicated region
    $region26: #{tpu_custom_call.1} parent=1 // pred_check
      _
    $region27: #{tpu_custom_call.1} parent=1 // pred_check_branch
      %272 = sbr.rel (0) target = $region29
    $region28: #{tpu_custom_call.1} parent=1 // pred_region
      %273 = dma.done [#allocation4], 2048
    $region29: #{tpu_custom_call.1} parent=1 // pred_fallthru
      _
    %274 = vsyncpa [#allocation3], 1
    %275 = vsyncpa [#allocation6], 1
    %276 = vsyncpa [#allocation4], 1

</llo_original>
